<compile_context>
chip_gen: v7x
topology: tpu7x:2x2x1
jax: 0.10.0
libtpu: 0.0.40
codegen_flags: <defaults>
</compile_context>

<pallas_src>
import functools

import jax
import jax.numpy as jnp
from jax.experimental import pallas as pl
from jax.experimental.pallas import tpu as pltpu

LANES = 128              # vreg lane width
SUB = 8                  # f32 sublane multiple
MAX_BLOCK_ROWS = 4096    # (4096, 128) f32 = 2 MiB per stream per pipeline buffer
VMEM_LIMIT_BYTES = 48 * 1024 * 1024


def _static_int_pow(x, n):
    """x ** n for a static Python int n >= 0 using only VPU multiplies."""
    if n == 0:
        return jnp.ones_like(x)
    result = None
    base = x
    while n > 0:
        if n & 1:
            result = base if result is None else result * base
        n >>= 1
        if n:
            base = base * base
    return result


def _focal_sum_kernel(x_ref, t_ref, out_ref, *, gamma, block_rows,
                      tiles_per_split, n_valid, binary_targets):
    """Accumulate per-element focal values (pre-alpha) into an (8,128) block.

    The output BlockSpec maps every step of the inner (reduction) grid axis to
    the same tiny block, so it stays resident in VMEM and is written back to
    HBM once per parallel split (4 KiB)."""
    p = pl.program_id(0)
    j = pl.program_id(1)

    @pl.when(j == 0)
    def _init():
        out_ref[...] = jnp.zeros_like(out_ref)

    # Upcast after the DMA: streams may be bf16/int to halve HBM traffic.
    x = x_ref[...].astype(jnp.float32)
    t = t_ref[...].astype(jnp.float32)

    # Numerically stable BCE-with-logits; exp(-|x|) is computed exactly once.
    e = jnp.exp(-jnp.abs(x))                              # EUP
    bce = jnp.maximum(x, 0.0) - x * t + jnp.log(1.0 + e)  # EUP log + VPU

    if binary_targets:
        # Exact for t in {0,1}: exp(-bce) = exp(x*t - max(x,0)) / (1+e), and the
        # numerator is 1 or e depending on sign agreement -> no second exp.
        same = (x >= 0.0) == (t >= 0.5)
        pt = jnp.where(same, 1.0, e) * pl.reciprocal(1.0 + e, approx=False)
    else:
        pt = jnp.exp(-bce)                                # general / soft targets

    q = 1.0 - pt
    if isinstance(gamma, int) and gamma >= 0:
        w = _static_int_pow(q, gamma)                     # pure VPU multiplies
    else:
        w = q ** float(gamma)                             # EUP exp/log fallback
    v = w * bce

    if n_valid is not None:
        # Mask the ragged tail: lane padding in the last valid row plus the
        # undefined rows of a partial last block (Pallas boundary block).
        start_row = (p * tiles_per_split + j) * block_rows
        row = jax.lax.broadcasted_iota(jnp.int32, v.shape, 0) + start_row
        lane = jax.lax.broadcasted_iota(jnp.int32, v.shape, 1)
        v = jnp.where(row * LANES + lane < n_valid, v, 0.0)

    # Fold (block_rows, 128) -> (8, 128) with leading-axis adds (pure VPU, no
    # cross-lane work).  The single tiny cross-lane reduce happens in the glue.
    out_ref[...] += v.reshape(block_rows // SUB, SUB, LANES).sum(axis=0)


def _focal_loss_xla(logits, targets, alpha, gamma):
    """Fused pure-XLA path for small inputs (pallas_call overhead dominates)."""
    x = logits.astype(jnp.float32)
    t = targets.astype(jnp.float32)
    bce = jnp.maximum(x, 0.0) - x * t + jnp.log1p(jnp.exp(-jnp.abs(x)))
    pt = jnp.exp(-bce)
    if isinstance(gamma, int) and gamma >= 0:
        w = _static_int_pow(1.0 - pt, gamma)
    else:
        w = (1.0 - pt) ** float(gamma)
    return jnp.mean(alpha * w * bce)


def _sublane_multiple(dtype):
    itemsize = jnp.dtype(dtype).itemsize
    return SUB * max(1, 4 // max(1, itemsize))   # f32 -> 8, bf16 -> 16, int8 -> 32


def focal_loss(logits, targets, alpha=0.25, gamma=2, *, binary_targets=False,
               min_pallas_elements=65536, max_block_rows=MAX_BLOCK_ROWS):
    """JAX/Pallas equivalent of FocalLoss.forward(inputs, targets).

    alpha / gamma must be static Python scalars.  binary_targets=True enables a
    cheaper (and for t in {0,1} mathematically exact) path that avoids a second
    exp per element; keep it False for soft targets.
    """
    assert logits.shape == targets.shape, (logits.shape, targets.shape)
    n_total = int(logits.size)
    if isinstance(gamma, float) and float(gamma).is_integer():
        gamma = int(gamma)

    if n_total == 0 or n_total < min_pallas_elements:
        return _focal_loss_xla(logits, targets, alpha, gamma)

    # Lane-dense flat view.  reshape(-1) of a contiguous array is free; the only
    # copy is a <128-element pad when n_total is not lane-aligned.
    x = logits.reshape(-1)
    t = targets.reshape(-1)
    rows = -(-n_total // LANES)
    lane_pad = rows * LANES - n_total
    if lane_pad:
        x = jnp.pad(x, (0, lane_pad))
        t = jnp.pad(t, (0, lane_pad))
    xf = x.reshape(rows, LANES)
    tf = t.reshape(rows, LANES)

    sub_m = max(_sublane_multiple(xf.dtype), _sublane_multiple(tf.dtype))
    block_rows = min(max_block_rows, rows)
    block_rows = -(-block_rows // sub_m) * sub_m          # sublane-tile aligned
    total_tiles = -(-rows // block_rows)

    # 2-way "parallel" leading axis so a 2-TC chip (v7x) can shard the
    # reduction; harmless (sequential) on 1-TC v5e/v6e since the per-split
    # accumulator is only 4 KiB.
    n_split = 2 if (total_tiles >= 2 and total_tiles % 2 == 0) else 1
    tiles_per_split = total_tiles // n_split

    covered = n_split * tiles_per_split * block_rows * LANES
    n_valid = None if covered == n_total else n_total     # static: skip mask if exact

    in_spec = pl.BlockSpec((block_rows, LANES),
                           lambda p, j: (p * tiles_per_split + j, 0))

    kernel = functools.partial(
        _focal_sum_kernel, gamma=gamma, block_rows=block_rows,
        tiles_per_split=tiles_per_split, n_valid=n_valid,
        binary_targets=bool(binary_targets))

    partials = pl.pallas_call(
        kernel,
        out_shape=jax.ShapeDtypeStruct((n_split, SUB, LANES), jnp.float32),
        grid_spec=pltpu.PrefetchScalarGridSpec(
            num_scalar_prefetch=0,
            grid=(n_split, tiles_per_split),
            in_specs=[in_spec, in_spec],
            out_specs=pl.BlockSpec((None, SUB, LANES), lambda p, j: (p, 0, 0)),
        ),
        compiler_params=pltpu.CompilerParams(
            dimension_semantics=("parallel", "arbitrary"),
            vmem_limit_bytes=VMEM_LIMIT_BYTES),
    )(xf, tf)

    total = jnp.sum(partials, dtype=jnp.float32)
    return total * alpha / n_total


if __name__ == "__main__":
    key = jax.random.PRNGKey(0)
    k1, k2, k3, k4 = jax.random.split(key, 4)

    def ref_loss(x, t, alpha=0.25, gamma=2):
        x = x.astype(jnp.float32)
        t = t.astype(jnp.float32)
        bce = jnp.maximum(x, 0.0) - x * t + jnp.log1p(jnp.exp(-jnp.abs(x)))
        pt = jnp.exp(-bce)
        return jnp.mean(alpha * (1.0 - pt) ** gamma * bce)

    # Small shape consistent with a dense-prediction FocalLoss input.
    B, C, H, W = 2, 4, 16, 16
    logits = jax.random.normal(k1, (B, C, H, W), dtype=jnp.float32)
    targets = (jax.random.uniform(k2, (B, C, H, W)) > 0.5).astype(jnp.float32)
    expected = ref_loss(logits, targets)

    # 1) Pallas kernel, general (soft-target-safe) path.
    loss_general = jax.block_until_ready(
        focal_loss(logits, targets, 0.25, 2, min_pallas_elements=0))
    # 2) Pallas kernel, binary-target fast path (one fewer EUP exp / element).
    loss_binary = jax.block_until_ready(
        focal_loss(logits, targets, 0.25, 2, binary_targets=True,
                   min_pallas_elements=0))
    # 3) Small-input XLA fallback path (default threshold).
    loss_fallback = jax.block_until_ready(focal_loss(logits, targets, 0.25, 2))

    assert jnp.allclose(loss_general, expected, atol=2e-5, rtol=2e-4), (loss_general, expected)
    assert jnp.allclose(loss_binary, expected, atol=2e-5, rtol=2e-4), (loss_binary, expected)
    assert jnp.allclose(loss_fallback, expected, atol=2e-5, rtol=2e-4), (loss_fallback, expected)

    # Ragged, non-lane-aligned bf16 input: exercises the in-kernel tail mask,
    # a multi-step grid with a partial last block, and in-kernel upcast.
    shp = (3, 5, 17, 19)
    logits2 = jax.random.normal(k3, shp, dtype=jnp.bfloat16)
    targets2 = (jax.random.uniform(k4, shp) > 0.5).astype(jnp.bfloat16)
    loss2 = jax.block_until_ready(
        focal_loss(logits2, targets2, 0.25, 2, binary_targets=True,
                   min_pallas_elements=0, max_block_rows=16))
    expected2 = ref_loss(logits2, targets2)
    assert jnp.allclose(loss2, expected2, atol=1e-3, rtol=1e-3), (loss2, expected2)

    # Lane-aligned input large enough to use the 2-way parallel split.
    shp3 = (4, 4, 32, 32)
    logits3 = jax.random.normal(k1, shp3, dtype=jnp.float32)
    targets3 = (jax.random.uniform(k2, shp3) > 0.5).astype(jnp.float32)
    loss3 = jax.block_until_ready(
        focal_loss(logits3, targets3, 0.25, 2, binary_targets=True,
                   min_pallas_elements=0, max_block_rows=32))
    expected3 = ref_loss(logits3, targets3)
    assert jnp.allclose(loss3, expected3, atol=2e-5, rtol=2e-4), (loss3, expected3)

    print("KERNEL_OK")
</pallas_src>

<mosaic_0001>
module attributes {stable_mosaic.version = 11 : i64} {
  func.func @_focal_sum_kernel(%arg0: i32, %arg1: i32, %arg2: memref<16x128xf32, #tpu.memory_space<vmem>>, %arg3: memref<16x128xf32, #tpu.memory_space<vmem>>, %arg4: memref<1x8x128xf32, #tpu.memory_space<vmem>>) attributes {dimension_semantics = [#tpu.dimension_semantics<parallel>, #tpu.dimension_semantics<arbitrary>], iteration_bounds = array<i64: 1, 1>, scalar_prefetch = 0 : i64, scratch_operands = 0 : i64, tpu.core_type = #tpu.core_type<tc>, window_params = [{transform_indices = @transform_0, window_bounds = array<i64: 16, 128>}, {transform_indices = @transform_1, window_bounds = array<i64: 16, 128>}, {transform_indices = @transform_2, window_bounds = array<i64: 1, 8, 128>}]} {
    %c0_i32 = arith.constant 0 : i32
    %0 = arith.cmpi eq, %arg1, %c0_i32 : i32
    %1 = arith.extui %0 : i1 to i32
    %c0_i32_0 = arith.constant 0 : i32
    %2 = arith.cmpi ne, %1, %c0_i32_0 : i32
    scf.if %2 {
      %cst_15 = arith.constant 0.000000e+00 : f32
      %32 = vector.broadcast %cst_15 : f32 to vector<8x128xf32>
      %c0_16 = arith.constant 0 : index
      %c0_17 = arith.constant 0 : index
      %c0_18 = arith.constant 0 : index
      %33 = vector.load %arg4[%c0_16, %c0_17, %c0_18] : memref<1x8x128xf32, #tpu.memory_space<vmem>>, vector<1x8x128xf32>
      %34 = vector.shape_cast %33 : vector<1x8x128xf32> to vector<8x128xf32>
      %35 = vector.shape_cast %32 : vector<8x128xf32> to vector<1x8x128xf32>
      tpu.vector_store %arg4[%c0_16, %c0_17, %c0_18], %35 {strides = array<i32>} : memref<1x8x128xf32, #tpu.memory_space<vmem>>, vector<1x8x128xf32>,
    } else {
    }
    %c0 = arith.constant 0 : index
    %c0_1 = arith.constant 0 : index
    %3 = vector.load %arg2[%c0, %c0_1] : memref<16x128xf32, #tpu.memory_space<vmem>>, vector<16x128xf32>
    %c0_2 = arith.constant 0 : index
    %c0_3 = arith.constant 0 : index
    %4 = vector.load %arg3[%c0_2, %c0_3] : memref<16x128xf32, #tpu.memory_space<vmem>>, vector<16x128xf32>
    %5 = math.absf %3 : vector<16x128xf32>
    %cst = arith.constant 0.000000e+00 : f32
    %6 = vector.broadcast %cst : f32 to vector<16x128xf32>
    %7 = arith.subf %6, %5 : vector<16x128xf32>
    %8 = math.exp %7 : vector<16x128xf32>
    %cst_4 = arith.constant 0.000000e+00 : f32
    %9 = vector.broadcast %cst_4 : f32 to vector<16x128xf32>
    %10 = arith.maximumf %3, %9 : vector<16x128xf32>
    %11 = arith.mulf %3, %4 : vector<16x128xf32>
    %12 = arith.subf %10, %11 : vector<16x128xf32>
    %cst_5 = arith.constant 1.000000e+00 : f32
    %13 = vector.broadcast %cst_5 : f32 to vector<16x128xf32>
    %14 = arith.addf %13, %8 : vector<16x128xf32>
    %15 = math.log %14 : vector<16x128xf32>
    %16 = arith.addf %12, %15 : vector<16x128xf32>
    %cst_6 = arith.constant 0.000000e+00 : f32
    %17 = vector.broadcast %cst_6 : f32 to vector<16x128xf32>
    %18 = arith.subf %17, %16 : vector<16x128xf32>
    %19 = math.exp %18 : vector<16x128xf32>
    %cst_7 = arith.constant 1.000000e+00 : f32
    %20 = vector.broadcast %cst_7 : f32 to vector<16x128xf32>
    %21 = arith.subf %20, %19 : vector<16x128xf32>
    %22 = arith.mulf %21, %21 : vector<16x128xf32>
    %23 = arith.mulf %22, %16 : vector<16x128xf32>
    %c0_8 = arith.constant 0 : index
    %c0_9 = arith.constant 0 : index
    %c0_10 = arith.constant 0 : index
    %24 = vector.load %arg4[%c0_8, %c0_9, %c0_10] : memref<1x8x128xf32, #tpu.memory_space<vmem>>, vector<1x8x128xf32>
    %25 = vector.shape_cast %24 : vector<1x8x128xf32> to vector<8x128xf32>
    %26 = vector.shape_cast %23 : vector<16x128xf32> to vector<2x8x128xf32>
    %cst_11 = arith.constant dense<0.000000e+00> : vector<8x128xf32>
    %27 = vector.multi_reduction <add>, %26, %cst_11 [0] : vector<2x8x128xf32> to vector<8x128xf32>
    %28 = arith.addf %25, %27 : vector<8x128xf32>
    %c0_12 = arith.constant 0 : index
    %c0_13 = arith.constant 0 : index
    %c0_14 = arith.constant 0 : index
    %29 = vector.load %arg4[%c0_12, %c0_13, %c0_14] : memref<1x8x128xf32, #tpu.memory_space<vmem>>, vector<1x8x128xf32>
    %30 = vector.shape_cast %29 : vector<1x8x128xf32> to vector<8x128xf32>
    %31 = vector.shape_cast %28 : vector<8x128xf32> to vector<1x8x128xf32>
    tpu.vector_store %arg4[%c0_12, %c0_13, %c0_14], %31 {strides = array<i32>} : memref<1x8x128xf32, #tpu.memory_space<vmem>>, vector<1x8x128xf32>,
    return
  }
  func.func @transform_0(%arg0: i32, %arg1: i32) -> (i32, i32) {
    %c1_i32 = arith.constant 1 : i32
    %0 = arith.muli %arg0, %c1_i32 : i32
    %1 = arith.addi %0, %arg1 : i32
    %c0_i32 = arith.constant 0 : i32
    %c0_i32_0 = arith.constant 0 : i32
    return %1, %c0_i32 : i32, i32
  }
  func.func @transform_1(%arg0: i32, %arg1: i32) -> (i32, i32) {
    %c1_i32 = arith.constant 1 : i32
    %0 = arith.muli %arg0, %c1_i32 : i32
    %1 = arith.addi %0, %arg1 : i32
    %c0_i32 = arith.constant 0 : i32
    %c0_i32_0 = arith.constant 0 : i32
    return %1, %c0_i32 : i32, i32
  }
  func.func @transform_2(%arg0: i32, %arg1: i32) -> (i32, i32, i32) {
    %c0_i32 = arith.constant 0 : i32
    %c0_i32_0 = arith.constant 0 : i32
    %c0_i32_1 = arith.constant 0 : i32
    return %arg0, %c0_i32, %c0_i32_0 : i32, i32, i32
  }
}

</mosaic_0001>

<llo_original>
// kernel: tpu_custom_call.1
$region0: #{tpu_custom_call.1}
  #allocation0 [shape = 'u32[]', space=smem, size = 0x4, offset = 0x4, fixed_abs, tag = 'smem constant byte address 0x4 - core index']
  #allocation1 [shape = 'u32[144,128]{1,0:T(1,128)}', space=vmem, size = 0x12000, scoped, tag = 'internal scratch']
  %s0 = inlined_call_operand.hbm [shape: f32[16,128], index: 0, kind: input, shape index: {}]
  %s1 = inlined_call_operand.hbm [shape: f32[16,128], index: 1, kind: input, shape index: {}]
  %s2 = inlined_call_operand.hbm [shape: f32[1,8,128], index: 2, kind: output, shape index: {}]
  %s3 = sld [smem:[#allocation0]]
  $region30: #{tpu_custom_call.1} parent=0
    _
  %s5 = ssub.s32 1, %s3
  %s6 = scalar_select 0, %s5, %s3
  $region1: #{tpu_custom_call.1} parent=0
    #allocation2 [shape = 'u8[8192]{0}', space=vmem, size = 0x2000, scoped, tag = 'input window, operand 0, single buffered']
    #allocation3 [shape = 's32[1]{0}', space=sflag, size = 0x4, scoped, tag = 'scoped memory for tpu_custom_call.1']
    #allocation4 [shape = 's32[1]{0}', space=sflag, size = 0x4, scoped, tag = 'scoped memory for tpu_custom_call.1']
    #allocation5 [shape = 'u8[8192]{0}', space=vmem, size = 0x2000, scoped, tag = 'input window, operand 1, single buffered']
    #allocation6 [shape = 's32[1]{0}', space=sflag, size = 0x4, scoped, tag = 'scoped memory for tpu_custom_call.1']
    #allocation7 [shape = 'u8[4096]{0}', space=vmem, size = 0x1000, scoped, tag = 'output window, operand 0, single buffered']
    %7 = vsyncpa [#allocation3], 0
    %8 = vsyncpa [#allocation6], 0
    %9 = vsyncpa [#allocation4], 0
    // Predicated region
    $region2: #{tpu_custom_call.1} parent=1 // pred_check
      _
    $region3: #{tpu_custom_call.1} parent=1 // pred_check_branch
      %11 = sbr.rel (0) target = $region5
    $region4: #{tpu_custom_call.1} parent=1 // pred_region
      %s12 = sadd.s32 0, 0
      %s13 = smul.u32 2, %s12
      %s15 = ssub.s32 256, 256
      %16 = vsyncadd [#allocation3], %s15
      %s17 = smul.addr %s13, 128
      %s18 = scalar_lea.hbm %s0, %s17
      %s19 = sshll.u32 [#allocation2], 4
      %s20 = int_to_ptr.vmem [resolvable:$true] %s19
      %25 = dma.hbm_to_vmem [thread:$0]  %s18, 256, %s20, [#allocation3], 128, 128, 8
    $region5: #{tpu_custom_call.1} parent=1 // pred_fallthru
      _
    // Predicated region
    $region6: #{tpu_custom_call.1} parent=1 // pred_check
      _
    $region7: #{tpu_custom_call.1} parent=1 // pred_check_branch
      %27 = sbr.rel (0) target = $region9
    $region8: #{tpu_custom_call.1} parent=1 // pred_region
      %s28 = sadd.s32 0, 0
      %s29 = smul.u32 2, %s28
      %s31 = ssub.s32 256, 256
      %32 = vsyncadd [#allocation6], %s31
      %s33 = smul.addr %s29, 128
      %s34 = scalar_lea.hbm %s1, %s33
      %s35 = sshll.u32 [#allocation5], 4
      %s36 = int_to_ptr.vmem [resolvable:$true] %s35
      %41 = dma.hbm_to_vmem [thread:$0]  %s34, 256, %s36, [#allocation6], 128, 128, 8
    $region9: #{tpu_custom_call.1} parent=1 // pred_fallthru
      _
    // Predicated region
    $region10: #{tpu_custom_call.1} parent=1 // pred_check
      _
    $region11: #{tpu_custom_call.1} parent=1 // pred_check_branch
      %43 = sbr.rel (0) target = $region13
    $region12: #{tpu_custom_call.1} parent=1 // pred_region
      %44 = dma.done [#allocation3], 256
    $region13: #{tpu_custom_call.1} parent=1 // pred_fallthru
      _
    // Predicated region
    $region14: #{tpu_custom_call.1} parent=1 // pred_check
      _
    $region15: #{tpu_custom_call.1} parent=1 // pred_check_branch
      %46 = sbr.rel (0) target = $region17
    $region16: #{tpu_custom_call.1} parent=1 // pred_region
      %47 = dma.done [#allocation6], 256
    $region17: #{tpu_custom_call.1} parent=1 // pred_fallthru
      _
    %s48 = sadd.s32 0, 0
    %s49 = smul.u32 2, %s48
    %s50 = sadd.s32 0, 0
    %s51 = smul.u32 2, %s50
    %p52 = scmp.eq.s32.totalorder 0, 0
    // Predicated region
    $region18: #{tpu_custom_call.1} parent=1 // pred_check
      %p53 = pneg %p52
    $region19: #{tpu_custom_call.1} parent=1 // pred_check_branch
      %55 = sbr.rel (%p53) target = $region21
    $region20: #{tpu_custom_call.1} parent=1 // pred_region
      %56 = vst [vmem:[#allocation7] sm:$0xff] 0.0
    $region21: #{tpu_custom_call.1} parent=1 // pred_fallthru
      _
    %v57 = vld [vmem:[#allocation2] sm:$0xff]
    %v58 = vld [vmem:[#allocation2 + $0x8] sm:$0xff]
    %v59 = vld [vmem:[#allocation5] sm:$0xff]
    %v60 = vld [vmem:[#allocation5 + $0x8] sm:$0xff]
    %v61 = vand.u32 2147483647, %v57
    %v62 = vand.u32 2147483647, %v58
    %v63 = vsub.f32 0.0, %v61
    %v64 = vsub.f32 0.0, %v62
    %v65 = vmul.f32 %v63, 1.442695
    %v66 = vpow.pop %v65
    %v67 = vmul.f32 %v64, 1.442695
    %v68 = vpow.pop %v67
    %v69 = vmax.f32 %v57, 0.0
    %v70 = vmax.f32 %v58, 0.0
    %v71 = vmul.f32 %v57, %v59
    %v72 = vmul.f32 %v58, %v60
    %v73 = vsub.f32 %v69, %v71
    %v74 = vsub.f32 %v70, %v72
    %v75 = vadd.f32 %v66, 1.0
    %v76 = vadd.f32 %v68, 1.0
    %v77 = vlog2.pop %v75
    %v78 = vmul.f32 %v77, 0.6931472
    %v79 = vlog2.pop %v76
    %v80 = vmul.f32 %v79, 0.6931472
    %v81 = vadd.f32 %v73, %v78
    %v82 = vadd.f32 %v74, %v80
    %v83 = vsub.f32 0.0, %v81
    %v84 = vsub.f32 0.0, %v82
    %v85 = vmul.f32 %v83, 1.442695
    %v86 = vpow.pop %v85
    %v87 = vmul.f32 %v84, 1.442695
    %v88 = vpow.pop %v87
    %v89 = vsub.f32 1.0, %v86
    %v90 = vsub.f32 1.0, %v88
    %v91 = vmul.f32 %v89, %v89
    %v92 = vmul.f32 %v90, %v90
    %v93 = vmul.f32 %v91, %v81
    %v94 = vmul.f32 %v92, %v82
    %v95 = vld [vmem:[#allocation7] sm:$0xff]
    %v96 = vadd.f32 %v93, %v94
    %v97 = vadd.f32 %v95, %v96
    %98 = vst [vmem:[#allocation7] sm:$0xff] %v97
    // Predicated region
    $region22: #{tpu_custom_call.1} parent=1 // pred_check
      _
    $region23: #{tpu_custom_call.1} parent=1 // pred_check_branch
      %100 = sbr.rel (0) target = $region25
    $region24: #{tpu_custom_call.1} parent=1 // pred_region
      %s102 = ssub.s32 128, 128
      %103 = vsyncadd [#allocation4], %s102
      %s105 = sshll.u32 [#allocation7], 4
      %s106 = int_to_ptr.vmem [resolvable:$true] %s105
      %108 = dma.vmem_to_hbm [thread:$0]  %s106, 128, %s2, [#allocation4]
    $region25: #{tpu_custom_call.1} parent=1 // pred_fallthru
      _
    // Predicated region
    $region26: #{tpu_custom_call.1} parent=1 // pred_check
      _
    $region27: #{tpu_custom_call.1} parent=1 // pred_check_branch
      %110 = sbr.rel (0) target = $region29
    $region28: #{tpu_custom_call.1} parent=1 // pred_region
      %111 = dma.done [#allocation4], 128
    $region29: #{tpu_custom_call.1} parent=1 // pred_fallthru
      _
    %112 = vsyncpa [#allocation3], 1
    %113 = vsyncpa [#allocation6], 1
    %114 = vsyncpa [#allocation4], 1

</llo_original>
